<compile_context>
chip_gen: v7x
topology: tpu7x:2x2x1
jax: 0.10.0
libtpu: 0.0.40
codegen_flags: <defaults>
</compile_context>

<pallas_src>
import jax
import jax.numpy as jnp
from jax.experimental import pallas as pl
from jax.experimental.pallas import tpu as pltpu


# --------------------------------------------------------------------------- #
# Kernel
# --------------------------------------------------------------------------- #
def disc_kernel(x_ref, w1t_ref, bw_ref, b2_ref, o_ref, acc_ref):
    # x_ref:   (TB, H)       activations for this batch tile (f32 in HBM)
    # w1t_ref: (H, TN)       fc1 weight^T column block (bf16 by default)
    # bw_ref:  (2, TN) f32   row 0 = fc1 bias slice, row 1 = fc2 weight slice
    # b2_ref:  (1,)   SMEM   fc2 bias scalar
    # o_ref:   (TB, 1)       sigmoid output
    # acc_ref: (TB, 1) f32   fc2 partial-sum carry across the n axis
    n = pl.program_id(1)

    @pl.when(n == 0)
    def _():
        acc_ref[...] = jnp.zeros_like(acc_ref)

    # fc1 partial (this column block) on the MXU, f32 accumulation.
    x = x_ref[...].astype(w1t_ref.dtype)          # full-rate MXU feed
    h = jnp.dot(x, w1t_ref[...], preferred_element_type=jnp.float32)
    h = jnp.maximum(h + bw_ref[0:1, :], 0.0)      # fc1 bias + ReLU
    # TODO(synk): dropout(p=0.25) is identity in eval mode; a training-mode
    # mask would use pltpu.prng_seed / pltpu.prng_random_bits here.

    # fc2 contribution of this column block: VPU multiply + lane reduction.
    acc_ref[...] += jnp.sum(h * bw_ref[1:2, :], axis=-1, keepdims=True)

    @pl.when(n == pl.num_programs(1) - 1)
    def _():
        z = acc_ref[...] + b2_ref[0]
        # Exact sigmoid (no approx reciprocal): negligible cost on (TB, 1).
        o_ref[...] = (1.0 / (1.0 + jnp.exp(-z))).astype(o_ref.dtype)


# --------------------------------------------------------------------------- #
# One-time parameter preparation (hoisted out of the forward pass)
# --------------------------------------------------------------------------- #
def prepare_params(w1, b1, w2, b2, *, weight_dtype=jnp.bfloat16):
    """Transpose / cast / merge weights ONCE (not per forward call)."""
    H = w1.shape[0]
    w1t = jnp.asarray(w1).T.astype(weight_dtype)                       # (H_in, H_out)
    bw = jnp.stack([jnp.asarray(b1).reshape(H),
                    jnp.asarray(w2).reshape(H)]).astype(jnp.float32)   # (2, H)
    b2_1d = jnp.asarray(b2).reshape(1).astype(jnp.float32)             # SMEM scalar
    return w1t, bw, b2_1d


# --------------------------------------------------------------------------- #
# Tile / VMEM sizing helpers
# --------------------------------------------------------------------------- #
def _vmem_capacity_bytes():
    """Physical VMEM per core; conservative 64 MiB (v7x) fallback."""
    try:
        info = pltpu.get_tpu_info()
        for attr in ("vmem_capacity_bytes", "vmem_bytes", "vmem_size_bytes"):
            v = getattr(info, attr, None)
            if v:
                return int(v)
    except Exception:
        pass
    return 64 * 1024 * 1024


def _tile_n_candidates(H, cap):
    """Multiples of 128 that divide H, <= cap, descending (else just H)."""
    if H % 128 != 0:
        return [H]
    cands = [t for t in range(128, H + 1, 128) if H % t == 0 and t <= max(cap, 128)]
    return sorted(set(cands), reverse=True) if cands else [H]


# --------------------------------------------------------------------------- #
# Forward wrapper
# --------------------------------------------------------------------------- #
def discriminator_forward(x, prepared, *, tile_b=256, tile_n=512):
    """y = sigmoid(relu(x @ w1.T + b1) @ w2.T + b2);  x: (B, H) -> (B, 1)."""
    w1t, bw, b2 = prepared
    B, H = x.shape
    w_bytes = jnp.dtype(w1t.dtype).itemsize
    x_bytes = jnp.dtype(x.dtype).itemsize

    # --- VMEM budget (generation aware) --------------------------------------
    phys = _vmem_capacity_bytes()
    vmem_limit = min(phys - 16 * 1024 * 1024, 112 * 1024 * 1024)   # 48 MiB on v7x, 112 on v5e/v6e
    budget = vmem_limit - 8 * 1024 * 1024                          # compiler headroom

    def footprint(tb, tn):
        return (2 * tb * H * x_bytes            # x tile (double-buffered)
                + 2 * H * tn * w_bytes          # W1^T block
                + 2 * 8 * tn * 4                # merged (2, tn) bias/w2 (sublane-padded)
                + 2 * tb * 128 * 4              # output block (lane-padded)
                + tb * 128 * 4)                 # (tb, 1) carry scratch

    # --- tile selection -------------------------------------------------------
    tn_cands = _tile_n_candidates(H, tile_n)
    if tile_b >= B:
        tb = B                                  # whole batch in one tile: W1 streams once
    else:
        tb = max(16, (tile_b // 16) * 16)       # 16-row multiples keep bf16 feed vreg-native

    ti = 0
    while footprint(tb, tn_cands[ti]) > budget:
        if ti + 1 < len(tn_cands):
            ti += 1                             # shrink the W1^T column block first
        elif tb > 8:
            tb = max(8, ((tb + 1) // 2 // 8) * 8)
        else:
            break
    tn = tn_cands[ti]

    # --- batch padding --------------------------------------------------------
    b_pad = pl.cdiv(B, tb) * tb
    if b_pad != B:
        x = jnp.pad(x, ((0, b_pad - B), (0, 0)))   # padded rows sliced off below
    num_b = b_pad // tb
    num_n = H // tn

    out = pl.pallas_call(
        disc_kernel,
        out_shape=jax.ShapeDtypeStruct((b_pad, 1), jnp.float32),
        grid_spec=pltpu.PrefetchScalarGridSpec(
            num_scalar_prefetch=0,
            grid=(num_b, num_n),
            in_specs=[
                pl.BlockSpec((tb, H), lambda i, n: (i, 0)),          # x: resident per batch tile
                pl.BlockSpec((H, tn), lambda i, n: (0, n)),          # W1^T column block
                pl.BlockSpec((2, tn), lambda i, n: (0, n)),          # [b1; w2] slice
                pl.BlockSpec(memory_space=pltpu.MemorySpace.SMEM),   # fc2 bias scalar
            ],
            out_specs=pl.BlockSpec((tb, 1), lambda i, n: (i, 0)),
            scratch_shapes=[pltpu.VMEM((tb, 1), jnp.float32)],       # fc2 carry
        ),
        compiler_params=pltpu.CompilerParams(
            dimension_semantics=("parallel", "arbitrary"),
            vmem_limit_bytes=int(vmem_limit),
        ),
    )(x, w1t, bw, b2)

    return out[:B]


# --------------------------------------------------------------------------- #
# Reference / init
# --------------------------------------------------------------------------- #
def init_params(key, hidden_1):
    """nn.Linear-style init: U(-1/sqrt(fan_in), 1/sqrt(fan_in))."""
    k1, k2, k3, k4 = jax.random.split(key, 4)
    bound = 1.0 / jnp.sqrt(hidden_1)
    w1 = jax.random.uniform(k1, (hidden_1, hidden_1), jnp.float32, -bound, bound)
    b1 = jax.random.uniform(k2, (hidden_1,), jnp.float32, -bound, bound)
    w2 = jax.random.uniform(k3, (1, hidden_1), jnp.float32, -bound, bound)
    b2 = jax.random.uniform(k4, (1,), jnp.float32, -bound, bound)
    return w1, b1, w2, b2


def reference_forward(x, w1, b1, w2, b2):
    h = jnp.maximum(x @ w1.T + b1, 0.0)
    return jax.nn.sigmoid(h @ w2.T + b2)


if __name__ == "__main__":
    key = jax.random.PRNGKey(0)
    k_x, k_p, k_x2, k_p2 = jax.random.split(key, 4)

    # Case 1: tiny shapes implied by the module; f32 weights, exact sigmoid.
    batch, hidden_1 = 16, 32
    x = jax.random.normal(k_x, (batch, hidden_1), jnp.float32)
    w1, b1, w2, b2 = init_params(k_p, hidden_1)
    prep_f32 = prepare_params(w1, b1, w2, b2, weight_dtype=jnp.float32)
    out = jax.block_until_ready(discriminator_forward(x, prep_f32))
    ref = reference_forward(x, w1, b1, w2, b2)
    assert out.shape == (batch, 1)
    assert jnp.allclose(out, ref, atol=2e-3), "f32 small-case mismatch vs reference"

    # Case 2: exercises batch tiling (parallel axis, 2 tiles), fc1-output (n)
    # tiling with the (tile_b, 1) carry, and the default bf16-weight path.
    batch2, hidden_2 = 256, 256
    x2 = jax.random.normal(k_x2, (batch2, hidden_2), jnp.float32)
    w1b, b1b, w2b, b2b = init_params(k_p2, hidden_2)
    prep_bf16 = prepare_params(w1b, b1b, w2b, b2b)           # bf16 weights (default)
    out2 = jax.block_until_ready(
        discriminator_forward(x2, prep_bf16, tile_b=128, tile_n=128))
    ref2 = reference_forward(x2, w1b, b1b, w2b, b2b)
    assert out2.shape == (batch2, 1)
    assert jnp.allclose(out2, ref2, atol=2e-2), "bf16 tiled-case mismatch vs reference"

    print("KERNEL_OK")
</pallas_src>

<mosaic_0001>
module attributes {stable_mosaic.version = 11 : i64} {
  func.func @disc_kernel(%arg0: i32, %arg1: i32, %arg2: memref<16x32xf32, #tpu.memory_space<vmem>>, %arg3: memref<32x32xf32, #tpu.memory_space<vmem>>, %arg4: memref<2x32xf32, #tpu.memory_space<vmem>>, %arg5: memref<1xf32, #tpu.memory_space<smem>>, %arg6: memref<16x1xf32, #tpu.memory_space<vmem>>, %arg7: memref<16x1xf32, #tpu.memory_space<vmem>>) attributes {dimension_semantics = [#tpu.dimension_semantics<parallel>, #tpu.dimension_semantics<arbitrary>], iteration_bounds = array<i64: 1, 1>, scalar_prefetch = 0 : i64, scratch_operands = 1 : i64, tpu.core_type = #tpu.core_type<tc>, window_params = [{transform_indices = @transform_0, window_bounds = array<i64: 16, 32>}, {transform_indices = @transform_1, window_bounds = array<i64: 32, 32>}, {transform_indices = @transform_2, window_bounds = array<i64: 2, 32>}, {transform_indices = @transform_3, window_bounds = array<i64: 1>}, {transform_indices = @transform_4, window_bounds = array<i64: 16, 1>}]} {
    %c0_i32 = arith.constant 0 : i32
    %0 = arith.cmpi eq, %arg1, %c0_i32 : i32
    %1 = arith.extui %0 : i1 to i32
    %c0_i32_0 = arith.constant 0 : i32
    %2 = arith.cmpi ne, %1, %c0_i32_0 : i32
    scf.if %2 {
      %cst_15 = arith.constant 0.000000e+00 : f32
      %22 = vector.broadcast %cst_15 : f32 to vector<16x1xf32>
      %c0_16 = arith.constant 0 : index
      %c0_17 = arith.constant 0 : index
      %23 = vector.load %arg7[%c0_16, %c0_17] : memref<16x1xf32, #tpu.memory_space<vmem>>, vector<16x1xf32>
      tpu.vector_store %arg7[%c0_16, %c0_17], %22 {strides = array<i32>} : memref<16x1xf32, #tpu.memory_space<vmem>>, vector<16x1xf32>,
    } else {
    }
    %c0 = arith.constant 0 : index
    %c0_1 = arith.constant 0 : index
    %3 = vector.load %arg2[%c0, %c0_1] : memref<16x32xf32, #tpu.memory_space<vmem>>, vector<16x32xf32>
    %c0_2 = arith.constant 0 : index
    %c0_3 = arith.constant 0 : index
    %4 = vector.load %arg3[%c0_2, %c0_3] : memref<32x32xf32, #tpu.memory_space<vmem>>, vector<32x32xf32>
    %cst = arith.constant dense<0.000000e+00> : vector<16x32xf32>
    %5 = tpu.matmul %3, %4, %cst {dimension_numbers = #tpu.dot_dimension_numbers<[1], [0], [0], [1], [0, 0, 1, 1], [], []>} : vector<16x32xf32>, vector<32x32xf32>, vector<16x32xf32> -> vector<16x32xf32>
    %c0_4 = arith.constant 0 : index
    %c0_5 = arith.constant 0 : index
    %6 = vector.load %arg4[%c0_4, %c0_5] : memref<2x32xf32, #tpu.memory_space<vmem>>, vector<1x32xf32>
    %7 = vector.broadcast %6 : vector<1x32xf32> to vector<16x32xf32>
    %8 = arith.addf %5, %7 : vector<16x32xf32>
    %cst_6 = arith.constant 0.000000e+00 : f32
    %9 = vector.broadcast %cst_6 : f32 to vector<16x32xf32>
    %10 = arith.maximumf %8, %9 : vector<16x32xf32>
    %c0_7 = arith.constant 0 : index
    %c0_8 = arith.constant 0 : index
    %11 = vector.load %arg7[%c0_7, %c0_8] : memref<16x1xf32, #tpu.memory_space<vmem>>, vector<16x1xf32>
    %c1 = arith.constant 1 : index
    %c0_9 = arith.constant 0 : index
    %12 = vector.load %arg4[%c1, %c0_9] : memref<2x32xf32, #tpu.memory_space<vmem>>, vector<1x32xf32>
    %13 = vector.broadcast %12 : vector<1x32xf32> to vector<16x32xf32>
    %14 = arith.mulf %10, %13 : vector<16x32xf32>
    %cst_10 = arith.constant dense<0.000000e+00> : vector<16xf32>
    %15 = vector.multi_reduction <add>, %14, %cst_10 [1] : vector<16x32xf32> to vector<16xf32>
    %16 = vector.shape_cast %15 : vector<16xf32> to vector<16x1xf32>
    %17 = arith.addf %11, %16 : vector<16x1xf32>
    %c0_11 = arith.constant 0 : index
    %c0_12 = arith.constant 0 : index
    %18 = vector.load %arg7[%c0_11, %c0_12] : memref<16x1xf32, #tpu.memory_space<vmem>>, vector<16x1xf32>
    tpu.vector_store %arg7[%c0_11, %c0_12], %17 {strides = array<i32>} : memref<16x1xf32, #tpu.memory_space<vmem>>, vector<16x1xf32>,
    %c0_i32_13 = arith.constant 0 : i32
    %19 = arith.cmpi eq, %arg1, %c0_i32_13 : i32
    %20 = arith.extui %19 : i1 to i32
    %c0_i32_14 = arith.constant 0 : i32
    %21 = arith.cmpi ne, %20, %c0_i32_14 : i32
    scf.if %21 {
      %c0_15 = arith.constant 0 : index
      %c0_16 = arith.constant 0 : index
      %22 = vector.load %arg7[%c0_15, %c0_16] : memref<16x1xf32, #tpu.memory_space<vmem>>, vector<16x1xf32>
      %c0_17 = arith.constant 0 : index
      %23 = memref.load %arg5[%c0_17] : memref<1xf32, #tpu.memory_space<smem>>
      %24 = vector.broadcast %23 : f32 to vector<16x1xf32>
      %25 = arith.addf %22, %24 : vector<16x1xf32>
      %cst_18 = arith.constant 0.000000e+00 : f32
      %26 = vector.broadcast %cst_18 : f32 to vector<16x1xf32>
      %27 = arith.subf %26, %25 : vector<16x1xf32>
      %28 = math.exp %27 : vector<16x1xf32>
      %cst_19 = arith.constant 1.000000e+00 : f32
      %29 = vector.broadcast %cst_19 : f32 to vector<16x1xf32>
      %30 = arith.addf %29, %28 : vector<16x1xf32>
      %cst_20 = arith.constant 1.000000e+00 : f32
      %31 = vector.broadcast %cst_20 : f32 to vector<16x1xf32>
      %32 = arith.divf %31, %30 : vector<16x1xf32>
      %c0_21 = arith.constant 0 : index
      %c0_22 = arith.constant 0 : index
      %33 = vector.load %arg6[%c0_21, %c0_22] : memref<16x1xf32, #tpu.memory_space<vmem>>, vector<16x1xf32>
      tpu.vector_store %arg6[%c0_21, %c0_22], %32 {strides = array<i32>} : memref<16x1xf32, #tpu.memory_space<vmem>>, vector<16x1xf32>,
    } else {
    }
    return
  }
  func.func @transform_0(%arg0: i32, %arg1: i32) -> (i32, i32) {
    %c0_i32 = arith.constant 0 : i32
    %c0_i32_0 = arith.constant 0 : i32
    return %arg0, %c0_i32 : i32, i32
  }
  func.func @transform_1(%arg0: i32, %arg1: i32) -> (i32, i32) {
    %c0_i32 = arith.constant 0 : i32
    %c0_i32_0 = arith.constant 0 : i32
    return %c0_i32, %arg1 : i32, i32
  }
  func.func @transform_2(%arg0: i32, %arg1: i32) -> (i32, i32) {
    %c0_i32 = arith.constant 0 : i32
    %c0_i32_0 = arith.constant 0 : i32
    return %c0_i32, %arg1 : i32, i32
  }
  func.func @transform_3(%arg0: i32, %arg1: i32) -> i32 {
    %c0_i32 = arith.constant 0 : i32
    %c0_i32_0 = arith.constant 0 : i32
    return %c0_i32 : i32
  }
  func.func @transform_4(%arg0: i32, %arg1: i32) -> (i32, i32) {
    %c0_i32 = arith.constant 0 : i32
    %c0_i32_0 = arith.constant 0 : i32
    return %arg0, %c0_i32 : i32, i32
  }
}

</mosaic_0001>

<llo_original>
// kernel: tpu_custom_call.1
$region0: #{tpu_custom_call.1}
  #allocation0 [shape = 'u32[]', space=smem, size = 0x4, offset = 0x4, fixed_abs, tag = 'smem constant byte address 0x4 - core index']
  #allocation1 [shape = 'u32[144,128]{1,0:T(1,128)}', space=vmem, size = 0x12000, scoped, tag = 'internal scratch']
  #allocation2 [shape = 'f32[16,1]{1,0:T(8,128)}', space=vmem, size = 0x2000, scoped, tag = 'scratch operand']
  #allocation3 [shape = 'f32[1]{0:T(128)S(6)}', space=smem, size = 0x200, scoped, tag = 'scoped memory for tpu_custom_call.1']
  %s0 = inlined_call_operand.hbm [shape: f32[16,32], index: 0, kind: input, shape index: {}]
  %s1 = inlined_call_operand.hbm [shape: f32[32,32], index: 1, kind: input, shape index: {}]
  %s2 = inlined_call_operand.vmem [shape: f32[2,32], index: 2, kind: input, shape index: {}]
  %s3 = inlined_call_operand.<no memory space> [shape: f32[1], index: 3, kind: input, shape index: {}]
  %s4 = inlined_call_operand.vmem [shape: f32[16,1], index: 4, kind: output, shape index: {}]
  %s5 = sld [smem:[#allocation0]]
  $region42: #{tpu_custom_call.1} parent=0
    _
  %s7 = ssub.s32 1, %s5
  %s8 = scalar_select 0, %s7, %s5
  %9 = sst [smem:[#allocation3]] %s3
  $region1: #{tpu_custom_call.1} parent=0
    #allocation4 [shape = 'u8[8192]{0}', space=vmem, size = 0x2000, scoped, tag = 'input window, operand 0, single buffered']
    #allocation5 [shape = 's32[1]{0}', space=sflag, size = 0x4, scoped, tag = 'scoped memory for tpu_custom_call.1']
    #allocation6 [shape = 'u8[16384]{0}', space=vmem, size = 0x4000, scoped, tag = 'input window, operand 1, single buffered']
    #allocation7 [shape = 's32[1]{0}', space=sflag, size = 0x4, scoped, tag = 'scoped memory for tpu_custom_call.1']
    %10 = vsyncpa [#allocation5], 0
    %11 = vsyncpa [#allocation7], 0
    // Predicated region
    $region2: #{tpu_custom_call.1} parent=1 // pred_check
      _
    $region3: #{tpu_custom_call.1} parent=1 // pred_check_branch
      %13 = sbr.rel (0) target = $region5
    $region4: #{tpu_custom_call.1} parent=1 // pred_region
      %s15 = ssub.s32 256, 256
      %16 = vsyncadd [#allocation5], %s15
      %s17 = sshll.u32 [#allocation4], 4
      %s18 = int_to_ptr.vmem [resolvable:$true] %s17
      %23 = dma.hbm_to_vmem [thread:$0]  %s0, 256, %s18, [#allocation5], 128, 128, 8
    $region5: #{tpu_custom_call.1} parent=1 // pred_fallthru
      _
    // Predicated region
    $region6: #{tpu_custom_call.1} parent=1 // pred_check
      _
    $region7: #{tpu_custom_call.1} parent=1 // pred_check_branch
      %25 = sbr.rel (0) target = $region9
    $region8: #{tpu_custom_call.1} parent=1 // pred_region
      %s27 = ssub.s32 512, 512
      %28 = vsyncadd [#allocation7], %s27
      %s29 = sshll.u32 [#allocation6], 4
      %s30 = int_to_ptr.vmem [resolvable:$true] %s29
      %35 = dma.hbm_to_vmem [thread:$0]  %s1, 512, %s30, [#allocation7], 128, 128, 8
    $region9: #{tpu_custom_call.1} parent=1 // pred_fallthru
      _
    // Predicated region
    $region10: #{tpu_custom_call.1} parent=1 // pred_check
      _
    $region11: #{tpu_custom_call.1} parent=1 // pred_check_branch
      %37 = sbr.rel (0) target = $region13
    $region12: #{tpu_custom_call.1} parent=1 // pred_region
      _
    $region13: #{tpu_custom_call.1} parent=1 // pred_fallthru
      _
    // Predicated region
    $region14: #{tpu_custom_call.1} parent=1 // pred_check
      _
    $region15: #{tpu_custom_call.1} parent=1 // pred_check_branch
      %39 = sbr.rel (0) target = $region17
    $region16: #{tpu_custom_call.1} parent=1 // pred_region
      _
    $region17: #{tpu_custom_call.1} parent=1 // pred_fallthru
      _
    // Predicated region
    $region18: #{tpu_custom_call.1} parent=1 // pred_check
      _
    $region19: #{tpu_custom_call.1} parent=1 // pred_check_branch
      %41 = sbr.rel (0) target = $region21
    $region20: #{tpu_custom_call.1} parent=1 // pred_region
      %42 = dma.done [#allocation5], 256
    $region21: #{tpu_custom_call.1} parent=1 // pred_fallthru
      _
    // Predicated region
    $region22: #{tpu_custom_call.1} parent=1 // pred_check
      _
    $region23: #{tpu_custom_call.1} parent=1 // pred_check_branch
      %44 = sbr.rel (0) target = $region25
    $region24: #{tpu_custom_call.1} parent=1 // pred_region
      %45 = dma.done [#allocation7], 512
    $region25: #{tpu_custom_call.1} parent=1 // pred_fallthru
      _
    %p46 = scmp.eq.s32.totalorder 0, 0
    // Predicated region
    $region26: #{tpu_custom_call.1} parent=1 // pred_check
      %p47 = pneg %p46
    $region27: #{tpu_custom_call.1} parent=1 // pred_check_branch
      %49 = sbr.rel (%p47) target = $region29
    $region28: #{tpu_custom_call.1} parent=1 // pred_region
      %vm50 = vcmask 7168
      %51 = vst.msk [vmem:[#allocation2] sm:$0xff] %vm50, 0.0
      %52 = vst.msk [vmem:[#allocation2 + $0x8] sm:$0xff] %vm50, 0.0
    $region29: #{tpu_custom_call.1} parent=1 // pred_fallthru
      _
    %v53 = vld [vmem:[#allocation4] sm:$0xff]
    %v54 = vld [vmem:[#allocation4 + $0x8] sm:$0xff]
    %v55 = vld [vmem:[#allocation6] sm:$0xff]
    %v56 = vld [vmem:[#allocation6 + $0x8] sm:$0xff]
    %v57 = vld [vmem:[#allocation6 + $0x10] sm:$0xff]
    %v58 = vld [vmem:[#allocation6 + $0x18] sm:$0xff]
    %v59 = vld [vmem:[%s2] sm:$0x1]
    %v60 = vlaneseq
    %v61 = vshrl.u32 %v60, 7
    %v62 = vsub.s32 0, %v61
    %v63 = vrot.slane %v59, %v62
    %vm64 = vcmask 261120
    %v66 = vsel %vm64, %v53, 0
    %v69 = vsel %vm64, %v54, 0
    %71 = vmatprep.subr.mxu0 0.0
    %72 = vmatpush1.msra.mxu0 %v55
    %73 = vmatprep.subr.mxu0 0.0
    %74 = vmatpush1.msra.mxu0 %v56
    %75 = vmatprep.subr.mxu0 0.0
    %76 = vmatpush1.msra.mxu0 %v57
    %77 = vmatprep.subr.mxu0 0.0
    %78 = vmatpush1.msra.mxu0 %v58
    %79 = vmatprep.subr.mxu0 0.0
    %80 = vmatpush1.msra.mxu0 0.0
    %81 = vmatprep.subr.mxu0 0.0
    %82 = vmatpush1.msra.mxu0 0.0
    %83 = vmatprep.subr.mxu0 0.0
    %84 = vmatpush1.msra.mxu0 0.0
    %85 = vmatprep.subr.mxu0 0.0
    %86 = vmatpush1.msra.mxu0 0.0
    %87 = vmatprep.subr.mxu0 0.0
    %88 = vmatpush1.msra.mxu0 0.0
    %89 = vmatprep.subr.mxu0 0.0
    %90 = vmatpush1.msra.mxu0 0.0
    %91 = vmatprep.subr.mxu0 0.0
    %92 = vmatpush1.msra.mxu0 0.0
    %93 = vmatprep.subr.mxu0 0.0
    %94 = vmatpush1.msra.mxu0 0.0
    %95 = vmatprep.subr.mxu0 0.0
    %96 = vmatpush1.msra.mxu0 0.0
    %97 = vmatprep.subr.mxu0 0.0
    %98 = vmatpush1.msra.mxu0 0.0
    %99 = vmatprep.subr.mxu0 0.0
    %100 = vmatpush1.msra.mxu0 0.0
    %101 = vmatprep.subr.mxu0 0.0
    %102 = vmatpush1.msra.mxu0 0.0
    %103 = vmatprep.subr.mxu0 0.0
    %104 = vmatpush1.msra.mxu0 0.0
    %105 = vmatprep.subr.mxu0 0.0
    %106 = vmatpush1.msra.mxu0 0.0
    %107 = vmatprep.subr.mxu0 0.0
    %108 = vmatpush1.msra.mxu0 0.0
    %109 = vmatprep.subr.mxu0 0.0
    %110 = vmatpush1.msra.mxu0 0.0
    %111 = vmatprep.subr.mxu0 0.0
    %112 = vmatpush1.msra.mxu0 0.0
    %113 = vmatprep.subr.mxu0 0.0
    %114 = vmatpush1.msra.mxu0 0.0
    %115 = vmatprep.subr.mxu0 0.0
    %116 = vmatpush1.msra.mxu0 0.0
    %117 = vmatprep.subr.mxu0 0.0
    %118 = vmatpush1.msra.mxu0 0.0
    %119 = vmatprep.subr.mxu0 0.0
    %120 = vmatpush1.msra.mxu0 0.0
    %121 = vmatprep.subr.mxu0 0.0
    %122 = vmatpush1.msra.mxu0 0.0
    %123 = vmatprep.subr.mxu0 0.0
    %124 = vmatpush1.msra.mxu0 0.0
    %125 = vmatprep.subr.mxu0 0.0
    %126 = vmatpush1.msra.mxu0 0.0
    %127 = vmatprep.subr.mxu0 0.0
    %128 = vmatpush1.msra.mxu0 0.0
    %129 = vmatprep.subr.mxu0 0.0
    %130 = vmatpush1.msra.mxu0 0.0
    %131 = vmatprep.subr.mxu0 0.0
    %132 = vmatpush1.msra.mxu0 0.0
    %133 = vmatprep.subr.mxu0 0.0
    %134 = vmatpush1.msra.mxu0 0.0
    %135 = vmatprep.mubr.f32.mxu0 0.0
    %136 = vmatmul.mubr.f32.gmra.mrb[0].mxu0 %v66
    %v137 = vpop.f32.mrb[0].mxu0
    %v138 = vadd.f32 %v63, %v137
    %v139 = vpop.f32.mrb[0].mxu0
    %140 = vmatprep.mubr.f32.mxu0 0.0
    %141 = vmatmul.mubr.f32.gmra.mrb[0].mxu0 %v69
    %v142 = vpop.f32.mrb[0].mxu0
    %v143 = vadd.f32 %v63, %v142
    %v144 = vpop.f32.mrb[0].mxu0
    %145 = vdwg.mxu0
    %v146 = vmax.f32 %v138, 0.0
    %v147 = vmax.f32 %v143, 0.0
    %v148 = vld [vmem:[#allocation2] sm:$0xff]
    %v149 = vld [vmem:[#allocation2 + $0x8] sm:$0xff]
    %v150 = vld [vmem:[%s2 + $0x1] sm:$0x1]
    %v151 = vlaneseq
    %v152 = vshrl.u32 %v151, 7
    %v153 = vsub.s32 0, %v152
    %v154 = vrot.slane %v150, %v153
    %v155 = vmul.f32 %v146, %v154
    %v156 = vmul.f32 %v147, %v154
    %v157 = vsel %vm64, %v155, 0.0
    %158 = vadd.xlane.f32.xlu0 %v157
    %v159 = vpop.xlane.xlu0 %158
    %v160 = vsel %vm64, %v156, 0.0
    %161 = vadd.xlane.f32.xlu0 %v160
    %v162 = vpop.xlane.xlu0 %161
    %v163 = vadd.f32 %v148, %v159
    %v164 = vadd.f32 %v149, %v162
    %vm165 = vcmask 7168
    %166 = vst.msk [vmem:[#allocation2] sm:$0xff] %vm165, %v163
    %167 = vst.msk [vmem:[#allocation2 + $0x8] sm:$0xff] %vm165, %v164
    // Predicated region
    $region30: #{tpu_custom_call.1} parent=1 // pred_check
      %p168 = pneg %p46
    $region31: #{tpu_custom_call.1} parent=1 // pred_check_branch
      %170 = sbr.rel (%p168) target = $region33
    $region32: #{tpu_custom_call.1} parent=1 // pred_region
      %v171 = vld [vmem:[#allocation2] sm:$0xff]
      %v172 = vld [vmem:[#allocation2 + $0x8] sm:$0xff]
      %s173 = sld [smem:[#allocation3]]
      %v174 = vstv %s173
      %v175 = vadd.f32 %v171, %v174
      %v176 = vadd.f32 %v172, %v174
      %v177 = vsub.f32 0.0, %v175
      %v178 = vsub.f32 0.0, %v176
      %v179 = vmul.f32 %v177, 1.442695
      %v180 = vpow.pop %v179
      %v181 = vmul.f32 %v178, 1.442695
      %v182 = vpow.pop %v181
      %v183 = vadd.f32 %v180, 1.0
      %v184 = vadd.f32 %v182, 1.0
      %v185 = vrcp.pop %v183
      %v186 = vmul.f32 1.0, %v185
      %v187 = vrcp.pop %v184
      %v188 = vmul.f32 1.0, %v187
      %189 = vst.msk [vmem:[%s4] sm:$0xff] %vm165, %v186
      %190 = vst.msk [vmem:[%s4 + $0x8] sm:$0xff] %vm165, %v188
    $region33: #{tpu_custom_call.1} parent=1 // pred_fallthru
      _
    // Predicated region
    $region34: #{tpu_custom_call.1} parent=1 // pred_check
      _
    $region35: #{tpu_custom_call.1} parent=1 // pred_check_branch
      %192 = sbr.rel (0) target = $region37
    $region36: #{tpu_custom_call.1} parent=1 // pred_region
      _
    $region37: #{tpu_custom_call.1} parent=1 // pred_fallthru
      _
    // Predicated region
    $region38: #{tpu_custom_call.1} parent=1 // pred_check
      _
    $region39: #{tpu_custom_call.1} parent=1 // pred_check_branch
      %194 = sbr.rel (0) target = $region41
    $region40: #{tpu_custom_call.1} parent=1 // pred_region
      _
    $region41: #{tpu_custom_call.1} parent=1 // pred_fallthru
      _
    %195 = vsyncpa [#allocation5], 1
    %196 = vsyncpa [#allocation7], 1

</llo_original>
